<compile_context>
chip_gen: v5e
topology: v5e:2x2
jax: 0.10.0
libtpu: 0.0.40
codegen_flags: <defaults>
</compile_context>

<pallas_src>
import math

import jax
import jax.numpy as jnp
from jax.experimental import pallas as pl
from jax.experimental.pallas import tpu as pltpu


def make_bpr_loss_kernel(*, sim_scale, tanh_scale, margin, batch, num_cols,
                         row_tile, mxu_bf16):
    B, M, TB = batch, num_cols, row_tile
    mxu_dtype = jnp.bfloat16 if mxu_bf16 else jnp.float32

    def kernel(a_ref, b_raw_ref, out_ref, b_cache, acc_dense, acc_hinge):
        i = pl.program_id(0)

        @pl.when(i == 0)
        def _init():
            # tanh + (optional) bf16 cast of the full (M, D) b: done ONCE and
            # reused by every row tile from the persistent VMEM cache.
            b_cache[...] = jnp.tanh(
                b_raw_ref[...].astype(jnp.float32) * tanh_scale
            ).astype(mxu_dtype)
            acc_dense[...] = jnp.zeros_like(acc_dense)
            acc_hinge[...] = jnp.zeros_like(acc_hinge)

        a = a_ref[...].astype(jnp.float32)                       # (TB, D) f32
        a_scaled = a * sim_scale           # fold sim scale into the small operand
        bin_q = jnp.tanh(a * tanh_scale)   # binarized query reps (f32 EUP)

        # One MXU pass for both score matrices (shared RHS b), bf16 operands
        # with f32 accumulation; contraction over last dims (no b.T copy).
        # TODO(synk): on v5e (4x128 MXU) two separate (TB, D) dots would avoid
        # the (2TB, D) concat copy with no MXU downside.
        lhs = jnp.concatenate([a_scaled, bin_q], axis=0).astype(mxu_dtype)
        both = jax.lax.dot_general(
            lhs, b_cache[...],
            dimension_numbers=(((1,), (1,)), ((), ())),
            preferred_element_type=jnp.float32)                  # (2TB, M) f32
        scores = both[:TB]        # dense scores (already * sim_scale)
        bin_scores = both[TB:]    # binarized-query scores

        # Positive (diagonal) entries: global row r pairs with column r.
        # Extract them from the SAME matrices used for the loss (no separate
        # f32 dot -> no bf16/f32 residual bias), and mask the hinge diagonal
        # out exactly, mirroring torch.masked_select on the off-diagonal.
        row_ids = jax.lax.broadcasted_iota(jnp.int32, (TB, M), 0) + i * TB
        col_ids = jax.lax.broadcasted_iota(jnp.int32, (TB, M), 1)
        pos_mask = row_ids == col_ids                            # (TB, M) bool
        diag_dense = jnp.sum(jnp.where(pos_mask, scores, 0.0),
                             axis=-1, keepdims=True)             # (TB, 1)
        diag_bin = jnp.sum(jnp.where(pos_mask, bin_scores, 0.0),
                           axis=-1, keepdims=True)               # (TB, 1)

        # Dense-loss partial: logsumexp(scores_r) - scores_r[r], per row.
        row_max = jnp.max(scores, axis=-1, keepdims=True)
        lse = row_max + jnp.log(
            jnp.sum(jnp.exp(scores - row_max), axis=-1, keepdims=True))
        acc_dense[...] += lse - diag_dense                        # (TB, 1)

        # Binary-loss partial: hinge over off-diagonal columns only.
        hinge = jnp.maximum(margin - diag_bin + bin_scores, 0.0)  # (TB, M)
        hinge = jnp.where(pos_mask, 0.0, hinge)
        acc_hinge[...] += jnp.sum(hinge, axis=-1, keepdims=True)  # (TB, 1)

        @pl.when(i == pl.num_programs(0) - 1)
        def _finalize():
            total = (jnp.sum(acc_dense[...], keepdims=True) / float(B)
                     + jnp.sum(acc_hinge[...], keepdims=True) / float(B * (M - 1)))
            out_ref[0, 0] = total[0, 0]

    return kernel


def _pick_vmem_limit_bytes(TB, M, D, cache_itemsize):
    """Size the scoped-VMEM limit from actual buffers, capped by physical VMEM."""
    a_tile = 2 * TB * D * 4                        # double-buffered anchor tile
    b_raw = 2 * M * D * 4                          # raw b (worst case 2 buffers)
    b_cache = M * D * cache_itemsize               # persistent tanh'd cache
    working = 8 * TB * M * 4 + 6 * TB * D * 4      # scores/exp/hinge/lhs live set
    need = a_tile + b_raw + b_cache + working + (4 << 20)
    try:
        phys = int(pltpu.get_tpu_info().vmem_capacity_bytes)
    except Exception:
        phys = 64 << 20                            # v7x-conservative fallback
    cap = int(phys * 3 // 4)                       # headroom for compiler scratch
    return int(max(min(need, cap), 16 << 20))


def bpr_loss(embeddings_a, embeddings_b_raw, *, scale=1.0,
             binary_ranking_loss_margin=2.0, hashnet_gamma=0.1, global_step=0,
             row_tile=128, mxu_bf16=True):
    """embeddings_a: (B, D); embeddings_b_raw: (M, D) pre-tanh concat of reps[1:]."""
    B, D = embeddings_a.shape
    M, Db = embeddings_b_raw.shape
    assert Db == D, (D, Db)
    # Layout contract of BPRLoss: column i of the score matrix is the positive
    # for row i (reps[1:] concatenated along axis 0, positives first) => M >= B.
    assert M >= B and M > 1, (B, M)
    # Perf note (v6e/v7x): D and M that are multiples of 128 (256 preferred)
    # avoid masked vregs / partial MXU tiles; keep row_tile at >= 128.

    tanh_scale = math.pow(1.0 + global_step * hashnet_gamma, 0.5)

    # Row tiling over B; b is tanh'd once (grid step 0) and stays resident.
    TB = B if B <= row_tile else row_tile
    assert B % TB == 0, (B, TB)
    grid = (B // TB,)

    cache_dtype = jnp.bfloat16 if mxu_bf16 else jnp.float32
    kernel = make_bpr_loss_kernel(
        sim_scale=float(scale), tanh_scale=float(tanh_scale),
        margin=float(binary_ranking_loss_margin), batch=B, num_cols=M,
        row_tile=TB, mxu_bf16=mxu_bf16)

    vmem_limit = _pick_vmem_limit_bytes(TB, M, D, jnp.dtype(cache_dtype).itemsize)

    # TODO(synk): for large M (M*D*4 >~ 16-24 MiB) add an inner column grid
    # axis streaming (TB, TN) chunks of b with an online logsumexp + running
    # hinge sum so intermediates stay bounded on v7x's 64 MiB VMEM.
    def call(b_spec):
        return pl.pallas_call(
            kernel,
            out_shape=jax.ShapeDtypeStruct((1, 1), jnp.float32),
            grid=grid,
            in_specs=[
                pl.BlockSpec((TB, D), lambda i: (i, 0)),   # row tile of anchors
                b_spec,                                    # raw b, resident
            ],
            out_specs=pl.BlockSpec(memory_space=pltpu.MemorySpace.SMEM),
            scratch_shapes=[
                pltpu.VMEM((M, D), cache_dtype),     # tanh'd (binarized) b cache
                pltpu.VMEM((TB, 1), jnp.float32),    # dense-loss row partials
                pltpu.VMEM((TB, 1), jnp.float32),    # hinge-loss row partials
            ],
            compiler_params=pltpu.CompilerParams(
                # Accumulators / b-cache carry across row tiles -> sequential.
                # TODO(synk): v7x megacore: grid (2, B/(2*TB)) with the leading
                # axis "parallel" + per-core partial outputs reduced in JAX.
                dimension_semantics=("arbitrary",),
                vmem_limit_bytes=vmem_limit,
            ),
        )(embeddings_a, embeddings_b_raw)

    try:
        # b_raw's block index never changes -> single-buffer it (no pipelining
        # needed); halves its VMEM residency, which matters on v7x (64 MiB).
        out = call(pl.BlockSpec((M, D), lambda i: (0, 0),
                                pipeline_mode=pl.Buffered(1)))
    except Exception:
        # Fallback for jax builds without BlockSpec(pipeline_mode=...) support.
        out = call(pl.BlockSpec((M, D), lambda i: (0, 0)))
    return out[0, 0]


def bpr_loss_reference(embeddings_a, embeddings_b_raw, *, scale=1.0,
                       binary_ranking_loss_margin=2.0, hashnet_gamma=0.1,
                       global_step=0):
    """Plain-JAX f32 reference mirroring the PyTorch forward exactly."""
    tanh_scale = math.pow(1.0 + global_step * hashnet_gamma, 0.5)
    a = embeddings_a.astype(jnp.float32)
    b = jnp.tanh(embeddings_b_raw.astype(jnp.float32) * tanh_scale)
    B, M = a.shape[0], b.shape[0]

    scores = a @ b.T * scale
    logp = jax.nn.log_softmax(scores, axis=-1)
    dense_loss = -jnp.mean(logp[jnp.arange(B), jnp.arange(B)])

    bin_q = jnp.tanh(a * tanh_scale)
    bin_scores = bin_q @ b.T
    pos = bin_scores[jnp.arange(B), jnp.arange(B)][:, None]                 # (B, 1)
    mask = jnp.arange(M)[None, :] == jnp.arange(B)[:, None]
    hinge = jnp.maximum(binary_ranking_loss_margin - pos + bin_scores, 0.0)
    hinge = jnp.where(mask, 0.0, hinge)
    binary_loss = jnp.sum(hinge) / (B * (M - 1))
    return dense_loss + binary_loss


if __name__ == "__main__":
    key = jax.random.PRNGKey(0)
    B, D = 8, 128          # batch of triplets, embedding dim
    k_a, k_p, k_n = jax.random.split(key, 3)

    # reps[0] = anchors, reps[1] = positives, reps[2] = hard negatives
    anchors   = jax.random.normal(k_a, (B, D), dtype=jnp.float32)
    positives = jax.random.normal(k_p, (B, D), dtype=jnp.float32)
    negatives = jax.random.normal(k_n, (B, D), dtype=jnp.float32)

    # embeddings_b = cat(convert_to_binary(rep) for rep in reps[1:]) -- tanh in-kernel
    embeddings_b_raw = jnp.concatenate([positives, negatives], axis=0)   # (2B, D)

    loss = jax.block_until_ready(bpr_loss(anchors, embeddings_b_raw))
    ref = bpr_loss_reference(anchors, embeddings_b_raw)

    # bf16 MXU operands (f32 accumulation) => intentionally looser tolerance
    # than the pure-f32 reference (precision/performance tradeoff).
    assert jnp.allclose(loss, ref, rtol=2e-2, atol=5e-2), (loss, ref)
    print("KERNEL_OK")
</pallas_src>

<mosaic_0001>
module attributes {stable_mosaic.version = 11 : i64} {
  func.func @kernel(%arg0: i32, %arg1: memref<8x128xf32, #tpu.memory_space<vmem>>, %arg2: memref<16x128xf32, #tpu.memory_space<vmem>>, %arg3: memref<1x1xf32, #tpu.memory_space<smem>>, %arg4: memref<16x128xbf16, #tpu.memory_space<vmem>>, %arg5: memref<8x1xf32, #tpu.memory_space<vmem>>, %arg6: memref<8x1xf32, #tpu.memory_space<vmem>>) attributes {dimension_semantics = [#tpu.dimension_semantics<arbitrary>], iteration_bounds = array<i64: 1>, scalar_prefetch = 0 : i64, scratch_operands = 3 : i64, tpu.core_type = #tpu.core_type<tc>, window_params = [{transform_indices = @transform_0, window_bounds = array<i64: 8, 128>}, {pipeline_mode = #tpu.pipeline_mode<synchronous>, transform_indices = @transform_1, window_bounds = array<i64: 16, 128>}, {transform_indices = @transform_2, window_bounds = array<i64: 1, 1>}]} {
    %c0_i32 = arith.constant 0 : i32
    %0 = arith.cmpi eq, %arg0, %c0_i32 : i32
    %1 = arith.extui %0 : i1 to i32
    %c0_i32_0 = arith.constant 0 : i32
    %2 = arith.cmpi ne, %1, %c0_i32_0 : i32
    scf.if %2 {
      %c0_26 = arith.constant 0 : index
      %c0_27 = arith.constant 0 : index
      %58 = vector.load %arg2[%c0_26, %c0_27] : memref<16x128xf32, #tpu.memory_space<vmem>>, vector<16x128xf32>
      %cst_28 = arith.constant 1.000000e+00 : f32
      %59 = vector.broadcast %cst_28 : f32 to vector<16x128xf32>
      %60 = arith.mulf %58, %59 : vector<16x128xf32>
      %61 = math.tanh %60 : vector<16x128xf32>
      %62 = arith.truncf %61 : vector<16x128xf32> to vector<16x128xbf16>
      %c0_29 = arith.constant 0 : index
      %c0_30 = arith.constant 0 : index
      %63 = vector.load %arg4[%c0_29, %c0_30] : memref<16x128xbf16, #tpu.memory_space<vmem>>, vector<16x128xbf16>
      tpu.vector_store %arg4[%c0_29, %c0_30], %62 {strides = array<i32>} : memref<16x128xbf16, #tpu.memory_space<vmem>>, vector<16x128xbf16>,
      %cst_31 = arith.constant 0.000000e+00 : f32
      %64 = vector.broadcast %cst_31 : f32 to vector<8x1xf32>
      %c0_32 = arith.constant 0 : index
      %c0_33 = arith.constant 0 : index
      %65 = vector.load %arg5[%c0_32, %c0_33] : memref<8x1xf32, #tpu.memory_space<vmem>>, vector<8x1xf32>
      tpu.vector_store %arg5[%c0_32, %c0_33], %64 {strides = array<i32>} : memref<8x1xf32, #tpu.memory_space<vmem>>, vector<8x1xf32>,
      %cst_34 = arith.constant 0.000000e+00 : f32
      %66 = vector.broadcast %cst_34 : f32 to vector<8x1xf32>
      %c0_35 = arith.constant 0 : index
      %c0_36 = arith.constant 0 : index
      %67 = vector.load %arg6[%c0_35, %c0_36] : memref<8x1xf32, #tpu.memory_space<vmem>>, vector<8x1xf32>
      tpu.vector_store %arg6[%c0_35, %c0_36], %66 {strides = array<i32>} : memref<8x1xf32, #tpu.memory_space<vmem>>, vector<8x1xf32>,
    } else {
    }
    %c0 = arith.constant 0 : index
    %c0_1 = arith.constant 0 : index
    %3 = vector.load %arg1[%c0, %c0_1] : memref<8x128xf32, #tpu.memory_space<vmem>>, vector<8x128xf32>
    %cst = arith.constant 1.000000e+00 : f32
    %4 = vector.broadcast %cst : f32 to vector<8x128xf32>
    %5 = arith.mulf %3, %4 : vector<8x128xf32>
    %cst_2 = arith.constant 1.000000e+00 : f32
    %6 = vector.broadcast %cst_2 : f32 to vector<8x128xf32>
    %7 = arith.mulf %3, %6 : vector<8x128xf32>
    %8 = math.tanh %7 : vector<8x128xf32>
    %9 = tpu.concatenate %5, %8 in 0 : vector<8x128xf32>, vector<8x128xf32> -> vector<16x128xf32>
    %10 = arith.truncf %9 : vector<16x128xf32> to vector<16x128xbf16>
    %c0_3 = arith.constant 0 : index
    %c0_4 = arith.constant 0 : index
    %11 = vector.load %arg4[%c0_3, %c0_4] : memref<16x128xbf16, #tpu.memory_space<vmem>>, vector<16x128xbf16>
    %cst_5 = arith.constant dense<0.000000e+00> : vector<16x16xf32>
    %12 = tpu.matmul %10, %11, %cst_5 {dimension_numbers = #tpu.dot_dimension_numbers<[1], [1], [0], [0], [0, 0, 1, 0], [], []>} : vector<16x128xbf16>, vector<16x128xbf16>, vector<16x16xf32> -> vector<16x16xf32>
    %13 = vector.extract_strided_slice %12 {offsets = [0, 0], sizes = [8, 16], strides = [1, 1]} : vector<16x16xf32> to vector<8x16xf32>
    %14 = vector.extract_strided_slice %12 {offsets = [8, 0], sizes = [8, 16], strides = [1, 1]} : vector<16x16xf32> to vector<8x16xf32>
    %15 = tpu.iota {dimensions = array<i32: 0>} : vector<8x16xi32>
    %c8_i32 = arith.constant 8 : i32
    %16 = arith.muli %arg0, %c8_i32 : i32
    %17 = vector.broadcast %16 : i32 to vector<8x16xi32>
    %18 = arith.addi %15, %17 : vector<8x16xi32>
    %19 = tpu.iota {dimensions = array<i32: 1>} : vector<8x16xi32>
    %20 = arith.cmpi eq, %18, %19 : vector<8x16xi32>
    %cst_6 = arith.constant 0.000000e+00 : f32
    %21 = vector.broadcast %cst_6 : f32 to vector<8x16xf32>
    %22 = arith.select %20, %13, %21 : vector<8x16xi1>, vector<8x16xf32>
    %cst_7 = arith.constant dense<0.000000e+00> : vector<8xf32>
    %23 = vector.multi_reduction <add>, %22, %cst_7 [1] : vector<8x16xf32> to vector<8xf32>
    %24 = vector.shape_cast %23 : vector<8xf32> to vector<8x1xf32>
    %cst_8 = arith.constant 0.000000e+00 : f32
    %25 = vector.broadcast %cst_8 : f32 to vector<8x16xf32>
    %26 = arith.select %20, %14, %25 : vector<8x16xi1>, vector<8x16xf32>
    %cst_9 = arith.constant dense<0.000000e+00> : vector<8xf32>
    %27 = vector.multi_reduction <add>, %26, %cst_9 [1] : vector<8x16xf32> to vector<8xf32>
    %28 = vector.shape_cast %27 : vector<8xf32> to vector<8x1xf32>
    %cst_10 = arith.constant dense<0xFF800000> : vector<8xf32>
    %29 = vector.multi_reduction <maximumf>, %13, %cst_10 [1] : vector<8x16xf32> to vector<8xf32>
    %30 = vector.shape_cast %29 : vector<8xf32> to vector<8x1xf32>
    %31 = vector.broadcast %30 : vector<8x1xf32> to vector<8x16xf32>
    %32 = arith.subf %13, %31 : vector<8x16xf32>
    %33 = math.exp %32 : vector<8x16xf32>
    %cst_11 = arith.constant dense<0.000000e+00> : vector<8xf32>
    %34 = vector.multi_reduction <add>, %33, %cst_11 [1] : vector<8x16xf32> to vector<8xf32>
    %35 = vector.shape_cast %34 : vector<8xf32> to vector<8x1xf32>
    %36 = math.log %35 : vector<8x1xf32>
    %37 = arith.addf %30, %36 : vector<8x1xf32>
    %c0_12 = arith.constant 0 : index
    %c0_13 = arith.constant 0 : index
    %38 = vector.load %arg5[%c0_12, %c0_13] : memref<8x1xf32, #tpu.memory_space<vmem>>, vector<8x1xf32>
    %39 = arith.subf %37, %24 : vector<8x1xf32>
    %40 = arith.addf %38, %39 : vector<8x1xf32>
    %c0_14 = arith.constant 0 : index
    %c0_15 = arith.constant 0 : index
    %41 = vector.load %arg5[%c0_14, %c0_15] : memref<8x1xf32, #tpu.memory_space<vmem>>, vector<8x1xf32>
    tpu.vector_store %arg5[%c0_14, %c0_15], %40 {strides = array<i32>} : memref<8x1xf32, #tpu.memory_space<vmem>>, vector<8x1xf32>,
    %cst_16 = arith.constant 2.000000e+00 : f32
    %42 = vector.broadcast %cst_16 : f32 to vector<8x1xf32>
    %43 = arith.subf %42, %28 : vector<8x1xf32>
    %44 = vector.broadcast %43 : vector<8x1xf32> to vector<8x16xf32>
    %45 = arith.addf %44, %14 : vector<8x16xf32>
    %cst_17 = arith.constant 0.000000e+00 : f32
    %46 = vector.broadcast %cst_17 : f32 to vector<8x16xf32>
    %47 = arith.maximumf %45, %46 : vector<8x16xf32>
    %cst_18 = arith.constant 0.000000e+00 : f32
    %48 = vector.broadcast %cst_18 : f32 to vector<8x16xf32>
    %49 = arith.select %20, %48, %47 : vector<8x16xi1>, vector<8x16xf32>
    %c0_19 = arith.constant 0 : index
    %c0_20 = arith.constant 0 : index
    %50 = vector.load %arg6[%c0_19, %c0_20] : memref<8x1xf32, #tpu.memory_space<vmem>>, vector<8x1xf32>
    %cst_21 = arith.constant dense<0.000000e+00> : vector<8xf32>
    %51 = vector.multi_reduction <add>, %49, %cst_21 [1] : vector<8x16xf32> to vector<8xf32>
    %52 = vector.shape_cast %51 : vector<8xf32> to vector<8x1xf32>
    %53 = arith.addf %50, %52 : vector<8x1xf32>
    %c0_22 = arith.constant 0 : index
    %c0_23 = arith.constant 0 : index
    %54 = vector.load %arg6[%c0_22, %c0_23] : memref<8x1xf32, #tpu.memory_space<vmem>>, vector<8x1xf32>
    tpu.vector_store %arg6[%c0_22, %c0_23], %53 {strides = array<i32>} : memref<8x1xf32, #tpu.memory_space<vmem>>, vector<8x1xf32>,
    %c0_i32_24 = arith.constant 0 : i32
    %55 = arith.cmpi eq, %arg0, %c0_i32_24 : i32
    %56 = arith.extui %55 : i1 to i32
    %c0_i32_25 = arith.constant 0 : i32
    %57 = arith.cmpi ne, %56, %c0_i32_25 : i32
    scf.if %57 {
      %c0_26 = arith.constant 0 : index
      %c0_27 = arith.constant 0 : index
      %58 = vector.load %arg5[%c0_26, %c0_27] : memref<8x1xf32, #tpu.memory_space<vmem>>, vector<8x1xf32>
      %59 = vector.shape_cast %58 : vector<8x1xf32> to vector<1x8x1xf32>
      %cst_28 = arith.constant dense<0.000000e+00> : vector<1xf32>
      %60 = vector.multi_reduction <add>, %59, %cst_28 [1, 2] : vector<1x8x1xf32> to vector<1xf32>
      %61 = vector.shape_cast %60 : vector<1xf32> to vector<1x1x1xf32>
      %62 = vector.extract %61[0, 0, 0] : f32 from vector<1x1x1xf32>
      %63 = vector.broadcast %62 : f32 to vector<1x1xf32>
      %cst_29 = arith.constant 8.000000e+00 : f32
      %64 = vector.broadcast %cst_29 : f32 to vector<1x1xf32>
      %65 = arith.divf %63, %64 : vector<1x1xf32>
      %c0_30 = arith.constant 0 : index
      %c0_31 = arith.constant 0 : index
      %66 = vector.load %arg6[%c0_30, %c0_31] : memref<8x1xf32, #tpu.memory_space<vmem>>, vector<8x1xf32>
      %67 = vector.shape_cast %66 : vector<8x1xf32> to vector<1x8x1xf32>
      %cst_32 = arith.constant dense<0.000000e+00> : vector<1xf32>
      %68 = vector.multi_reduction <add>, %67, %cst_32 [1, 2] : vector<1x8x1xf32> to vector<1xf32>
      %69 = vector.shape_cast %68 : vector<1xf32> to vector<1x1x1xf32>
      %70 = vector.extract %69[0, 0, 0] : f32 from vector<1x1x1xf32>
      %71 = vector.broadcast %70 : f32 to vector<1x1xf32>
      %cst_33 = arith.constant 1.200000e+02 : f32
      %72 = vector.broadcast %cst_33 : f32 to vector<1x1xf32>
      %73 = arith.divf %71, %72 : vector<1x1xf32>
      %74 = arith.addf %65, %73 : vector<1x1xf32>
      %75 = vector.extract %74[0, 0] : f32 from vector<1x1xf32>
      %c0_34 = arith.constant 0 : index
      %c0_35 = arith.constant 0 : index
      %76 = memref.load %arg3[%c0_34, %c0_35] : memref<1x1xf32, #tpu.memory_space<smem>>
      memref.store %75, %arg3[%c0_34, %c0_35] : memref<1x1xf32, #tpu.memory_space<smem>>
    } else {
    }
    return
  }
  func.func @transform_0(%arg0: i32) -> (i32, i32) {
    %c0_i32 = arith.constant 0 : i32
    %c0_i32_0 = arith.constant 0 : i32
    return %arg0, %c0_i32 : i32, i32
  }
  func.func @transform_1(%arg0: i32) -> (i32, i32) {
    %c0_i32 = arith.constant 0 : i32
    %c0_i32_0 = arith.constant 0 : i32
    %c0_i32_1 = arith.constant 0 : i32
    return %c0_i32, %c0_i32_0 : i32, i32
  }
  func.func @transform_2(%arg0: i32) -> (i32, i32) {
    %c0_i32 = arith.constant 0 : i32
    %c0_i32_0 = arith.constant 0 : i32
    %c0_i32_1 = arith.constant 0 : i32
    return %c0_i32, %c0_i32_0 : i32, i32
  }
}

module attributes {stable_mosaic.version = 11 : i64} {
  func.func @kernel(%arg0: i32, %arg1: memref<8x128xf32, #tpu.memory_space<vmem>>, %arg2: memref<16x128xf32, #tpu.memory_space<vmem>>, %arg3: memref<1x1xf32, #tpu.memory_space<smem>>, %arg4: memref<16x128xbf16, #tpu.memory_space<vmem>>, %arg5: memref<8x1xf32, #tpu.memory_space<vmem>>, %arg6: memref<8x1xf32, #tpu.memory_space<vmem>>) attributes {dimension_semantics = [#tpu.dimension_semantics<arbitrary>], iteration_bounds = array<i64: 1>, scalar_prefetch = 0 : i64, scratch_operands = 3 : i64, tpu.core_type = #tpu.core_type<tc>, window_params = [{transform_indices = @transform_0, window_bounds = array<i64: 8, 128>}, {pipeline_mode = #tpu.pipeline_mode<synchronous>, transform_indices = @transform_1, window_bounds = array<i64: 16, 128>}, {transform_indices = @transform_2, window_bounds = array<i64: 1, 1>}]} {
    %c0_i32 = arith.constant 0 : i32
    %0 = arith.cmpi eq, %arg0, %c0_i32 : i32
    %1 = arith.extui %0 : i1 to i32
    %c0_i32_0 = arith.constant 0 : i32
    %2 = arith.cmpi ne, %1, %c0_i32_0 : i32
    scf.if %2 {
      %c0_26 = arith.constant 0 : index
      %c0_27 = arith.constant 0 : index
      %58 = vector.load %arg2[%c0_26, %c0_27] : memref<16x128xf32, #tpu.memory_space<vmem>>, vector<16x128xf32>
      %cst_28 = arith.constant 1.000000e+00 : f32
      %59 = vector.broadcast %cst_28 : f32 to vector<16x128xf32>
      %60 = arith.mulf %58, %59 : vector<16x128xf32>
      %61 = math.tanh %60 : vector<16x128xf32>
      %62 = arith.truncf %61 : vector<16x128xf32> to vector<16x128xbf16>
      %c0_29 = arith.constant 0 : index
      %c0_30 = arith.constant 0 : index
      %63 = vector.load %arg4[%c0_29, %c0_30] : memref<16x128xbf16, #tpu.memory_space<vmem>>, vector<16x128xbf16>
      tpu.vector_store %arg4[%c0_29, %c0_30], %62 {strides = array<i32>} : memref<16x128xbf16, #tpu.memory_space<vmem>>, vector<16x128xbf16>,
      %cst_31 = arith.constant 0.000000e+00 : f32
      %64 = vector.broadcast %cst_31 : f32 to vector<8x1xf32>
      %c0_32 = arith.constant 0 : index
      %c0_33 = arith.constant 0 : index
      %65 = vector.load %arg5[%c0_32, %c0_33] : memref<8x1xf32, #tpu.memory_space<vmem>>, vector<8x1xf32>
      tpu.vector_store %arg5[%c0_32, %c0_33], %64 {strides = array<i32>} : memref<8x1xf32, #tpu.memory_space<vmem>>, vector<8x1xf32>,
      %cst_34 = arith.constant 0.000000e+00 : f32
      %66 = vector.broadcast %cst_34 : f32 to vector<8x1xf32>
      %c0_35 = arith.constant 0 : index
      %c0_36 = arith.constant 0 : index
      %67 = vector.load %arg6[%c0_35, %c0_36] : memref<8x1xf32, #tpu.memory_space<vmem>>, vector<8x1xf32>
      tpu.vector_store %arg6[%c0_35, %c0_36], %66 {strides = array<i32>} : memref<8x1xf32, #tpu.memory_space<vmem>>, vector<8x1xf32>,
    } else {
    }
    %c0 = arith.constant 0 : index
    %c0_1 = arith.constant 0 : index
    %3 = vector.load %arg1[%c0, %c0_1] : memref<8x128xf32, #tpu.memory_space<vmem>>, vector<8x128xf32>
    %cst = arith.constant 1.000000e+00 : f32
    %4 = vector.broadcast %cst : f32 to vector<8x128xf32>
    %5 = arith.mulf %3, %4 : vector<8x128xf32>
    %cst_2 = arith.constant 1.000000e+00 : f32
    %6 = vector.broadcast %cst_2 : f32 to vector<8x128xf32>
    %7 = arith.mulf %3, %6 : vector<8x128xf32>
    %8 = math.tanh %7 : vector<8x128xf32>
    %9 = tpu.concatenate %5, %8 in 0 : vector<8x128xf32>, vector<8x128xf32> -> vector<16x128xf32>
    %10 = arith.truncf %9 : vector<16x128xf32> to vector<16x128xbf16>
    %c0_3 = arith.constant 0 : index
    %c0_4 = arith.constant 0 : index
    %11 = vector.load %arg4[%c0_3, %c0_4] : memref<16x128xbf16, #tpu.memory_space<vmem>>, vector<16x128xbf16>
    %cst_5 = arith.constant dense<0.000000e+00> : vector<16x16xf32>
    %12 = tpu.matmul %10, %11, %cst_5 {dimension_numbers = #tpu.dot_dimension_numbers<[1], [1], [0], [0], [0, 0, 1, 0], [], []>} : vector<16x128xbf16>, vector<16x128xbf16>, vector<16x16xf32> -> vector<16x16xf32>
    %13 = vector.extract_strided_slice %12 {offsets = [0, 0], sizes = [8, 16], strides = [1, 1]} : vector<16x16xf32> to vector<8x16xf32>
    %14 = vector.extract_strided_slice %12 {offsets = [8, 0], sizes = [8, 16], strides = [1, 1]} : vector<16x16xf32> to vector<8x16xf32>
    %15 = tpu.iota {dimensions = array<i32: 0>} : vector<8x16xi32>
    %c8_i32 = arith.constant 8 : i32
    %16 = arith.muli %arg0, %c8_i32 : i32
    %17 = vector.broadcast %16 : i32 to vector<8x16xi32>
    %18 = arith.addi %15, %17 : vector<8x16xi32>
    %19 = tpu.iota {dimensions = array<i32: 1>} : vector<8x16xi32>
    %20 = arith.cmpi eq, %18, %19 : vector<8x16xi32>
    %cst_6 = arith.constant 0.000000e+00 : f32
    %21 = vector.broadcast %cst_6 : f32 to vector<8x16xf32>
    %22 = arith.select %20, %13, %21 : vector<8x16xi1>, vector<8x16xf32>
    %cst_7 = arith.constant dense<0.000000e+00> : vector<8xf32>
    %23 = vector.multi_reduction <add>, %22, %cst_7 [1] : vector<8x16xf32> to vector<8xf32>
    %24 = vector.shape_cast %23 : vector<8xf32> to vector<8x1xf32>
    %cst_8 = arith.constant 0.000000e+00 : f32
    %25 = vector.broadcast %cst_8 : f32 to vector<8x16xf32>
    %26 = arith.select %20, %14, %25 : vector<8x16xi1>, vector<8x16xf32>
    %cst_9 = arith.constant dense<0.000000e+00> : vector<8xf32>
    %27 = vector.multi_reduction <add>, %26, %cst_9 [1] : vector<8x16xf32> to vector<8xf32>
    %28 = vector.shape_cast %27 : vector<8xf32> to vector<8x1xf32>
    %cst_10 = arith.constant dense<0xFF800000> : vector<8xf32>
    %29 = vector.multi_reduction <maximumf>, %13, %cst_10 [1] : vector<8x16xf32> to vector<8xf32>
    %30 = vector.shape_cast %29 : vector<8xf32> to vector<8x1xf32>
    %31 = vector.broadcast %30 : vector<8x1xf32> to vector<8x16xf32>
    %32 = arith.subf %13, %31 : vector<8x16xf32>
    %33 = math.exp %32 : vector<8x16xf32>
    %cst_11 = arith.constant dense<0.000000e+00> : vector<8xf32>
    %34 = vector.multi_reduction <add>, %33, %cst_11 [1] : vector<8x16xf32> to vector<8xf32>
    %35 = vector.shape_cast %34 : vector<8xf32> to vector<8x1xf32>
    %36 = math.log %35 : vector<8x1xf32>
    %37 = arith.addf %30, %36 : vector<8x1xf32>
    %c0_12 = arith.constant 0 : index
    %c0_13 = arith.constant 0 : index
    %38 = vector.load %arg5[%c0_12, %c0_13] : memref<8x1xf32, #tpu.memory_space<vmem>>, vector<8x1xf32>
    %39 = arith.subf %37, %24 : vector<8x1xf32>
    %40 = arith.addf %38, %39 : vector<8x1xf32>
    %c0_14 = arith.constant 0 : index
    %c0_15 = arith.constant 0 : index
    %41 = vector.load %arg5[%c0_14, %c0_15] : memref<8x1xf32, #tpu.memory_space<vmem>>, vector<8x1xf32>
    tpu.vector_store %arg5[%c0_14, %c0_15], %40 {strides = array<i32>} : memref<8x1xf32, #tpu.memory_space<vmem>>, vector<8x1xf32>,
    %cst_16 = arith.constant 2.000000e+00 : f32
    %42 = vector.broadcast %cst_16 : f32 to vector<8x1xf32>
    %43 = arith.subf %42, %28 : vector<8x1xf32>
    %44 = vector.broadcast %43 : vector<8x1xf32> to vector<8x16xf32>
    %45 = arith.addf %44, %14 : vector<8x16xf32>
    %cst_17 = arith.constant 0.000000e+00 : f32
    %46 = vector.broadcast %cst_17 : f32 to vector<8x16xf32>
    %47 = arith.maximumf %45, %46 : vector<8x16xf32>
    %cst_18 = arith.constant 0.000000e+00 : f32
    %48 = vector.broadcast %cst_18 : f32 to vector<8x16xf32>
    %49 = arith.select %20, %48, %47 : vector<8x16xi1>, vector<8x16xf32>
    %c0_19 = arith.constant 0 : index
    %c0_20 = arith.constant 0 : index
    %50 = vector.load %arg6[%c0_19, %c0_20] : memref<8x1xf32, #tpu.memory_space<vmem>>, vector<8x1xf32>
    %cst_21 = arith.constant dense<0.000000e+00> : vector<8xf32>
    %51 = vector.multi_reduction <add>, %49, %cst_21 [1] : vector<8x16xf32> to vector<8xf32>
    %52 = vector.shape_cast %51 : vector<8xf32> to vector<8x1xf32>
    %53 = arith.addf %50, %52 : vector<8x1xf32>
    %c0_22 = arith.constant 0 : index
    %c0_23 = arith.constant 0 : index
    %54 = vector.load %arg6[%c0_22, %c0_23] : memref<8x1xf32, #tpu.memory_space<vmem>>, vector<8x1xf32>
    tpu.vector_store %arg6[%c0_22, %c0_23], %53 {strides = array<i32>} : memref<8x1xf32, #tpu.memory_space<vmem>>, vector<8x1xf32>,
    %c0_i32_24 = arith.constant 0 : i32
    %55 = arith.cmpi eq, %arg0, %c0_i32_24 : i32
    %56 = arith.extui %55 : i1 to i32
    %c0_i32_25 = arith.constant 0 : i32
    %57 = arith.cmpi ne, %56, %c0_i32_25 : i32
    scf.if %57 {
      %c0_26 = arith.constant 0 : index
      %c0_27 = arith.constant 0 : index
      %58 = vector.load %arg5[%c0_26, %c0_27] : memref<8x1xf32, #tpu.memory_space<vmem>>, vector<8x1xf32>
      %59 = vector.shape_cast %58 : vector<8x1xf32> to vector<1x8x1xf32>
      %cst_28 = arith.constant dense<0.000000e+00> : vector<1xf32>
      %60 = vector.multi_reduction <add>, %59, %cst_28 [1, 2] : vector<1x8x1xf32> to vector<1xf32>
      %61 = vector.shape_cast %60 : vector<1xf32> to vector<1x1x1xf32>
      %62 = vector.extract %61[0, 0, 0] : f32 from vector<1x1x1xf32>
      %63 = vector.broadcast %62 : f32 to vector<1x1xf32>
      %cst_29 = arith.constant 8.000000e+00 : f32
      %64 = vector.broadcast %cst_29 : f32 to vector<1x1xf32>
      %65 = arith.divf %63, %64 : vector<1x1xf32>
      %c0_30 = arith.constant 0 : index
      %c0_31 = arith.constant 0 : index
      %66 = vector.load %arg6[%c0_30, %c0_31] : memref<8x1xf32, #tpu.memory_space<vmem>>, vector<8x1xf32>
      %67 = vector.shape_cast %66 : vector<8x1xf32> to vector<1x8x1xf32>
      %cst_32 = arith.constant dense<0.000000e+00> : vector<1xf32>
      %68 = vector.multi_reduction <add>, %67, %cst_32 [1, 2] : vector<1x8x1xf32> to vector<1xf32>
      %69 = vector.shape_cast %68 : vector<1xf32> to vector<1x1x1xf32>
      %70 = vector.extract %69[0, 0, 0] : f32 from vector<1x1x1xf32>
      %71 = vector.broadcast %70 : f32 to vector<1x1xf32>
      %cst_33 = arith.constant 1.200000e+02 : f32
      %72 = vector.broadcast %cst_33 : f32 to vector<1x1xf32>
      %73 = arith.divf %71, %72 : vector<1x1xf32>
      %74 = arith.addf %65, %73 : vector<1x1xf32>
      %75 = vector.extract %74[0, 0] : f32 from vector<1x1xf32>
      %c0_34 = arith.constant 0 : index
      %c0_35 = arith.constant 0 : index
      %76 = memref.load %arg3[%c0_34, %c0_35] : memref<1x1xf32, #tpu.memory_space<smem>>
      memref.store %75, %arg3[%c0_34, %c0_35] : memref<1x1xf32, #tpu.memory_space<smem>>
    } else {
    }
    return
  }
  func.func @transform_0(%arg0: i32) -> (i32, i32) {
    %c0_i32 = arith.constant 0 : i32
    %c0_i32_0 = arith.constant 0 : i32
    return %arg0, %c0_i32 : i32, i32
  }
  func.func @transform_1(%arg0: i32) -> (i32, i32) {
    %c0_i32 = arith.constant 0 : i32
    %c0_i32_0 = arith.constant 0 : i32
    %c0_i32_1 = arith.constant 0 : i32
    return %c0_i32, %c0_i32_0 : i32, i32
  }
  func.func @transform_2(%arg0: i32) -> (i32, i32) {
    %c0_i32 = arith.constant 0 : i32
    %c0_i32_0 = arith.constant 0 : i32
    %c0_i32_1 = arith.constant 0 : i32
    return %c0_i32, %c0_i32_0 : i32, i32
  }
}

</mosaic_0001>

<llo_original>
// kernel: tpu_custom_call.1
$region0: #{tpu_custom_call.1}
  #allocation0 [shape = 'u32[]', space=smem, size = 0x4, offset = 0x4, fixed_abs, tag = 'smem constant byte address 0x4 - core index']
  #allocation1 [shape = 'u32[72,128]{1,0:T(1,128)}', space=vmem, size = 0x9000, scoped, tag = 'internal scratch']
  #allocation2 [shape = 'bf16[16,128]{1,0:T(8,128)(2,1)}', space=vmem, size = 0x1000, scoped, tag = 'scratch operand']
  #allocation3 [shape = 'f32[8,1]{1,0:T(8,128)}', space=vmem, size = 0x1000, scoped, tag = 'scratch operand']
  #allocation4 [shape = 'f32[8,1]{1,0:T(8,128)}', space=vmem, size = 0x1000, scoped, tag = 'scratch operand']
  %s0 = inlined_call_operand.hbm [shape: f32[8,128], index: 0, kind: input, shape index: {}]
  %s1 = inlined_call_operand.hbm [shape: f32[16,128], index: 1, kind: input, shape index: {}]
  %s2 = inlined_call_operand.hbm [shape: f32[1,1], index: 2, kind: output, shape index: {}]
  %s3 = sld [smem:[#allocation0]]
  $region34: #{tpu_custom_call.1} parent=0
    _
  %s5 = ssub.s32 1, %s3
  %s6 = scalar_select 0, %s5, %s3
  $region1: #{tpu_custom_call.1} parent=0
    #allocation5 [shape = 'u8[4096]{0}', space=vmem, size = 0x1000, scoped, tag = 'input window, operand 0, single buffered']
    #allocation6 [shape = 's32[1]{0}', space=sflag, size = 0x4, scoped, tag = 'scoped memory for tpu_custom_call.1']
    #allocation7 [shape = 's32[1]{0}', space=sflag, size = 0x4, scoped, tag = 'scoped memory for tpu_custom_call.1']
    #allocation8 [shape = 'u8[8192]{0}', space=vmem, size = 0x2000, scoped, tag = 'input window, operand 1, single buffered']
    #allocation9 [shape = 's32[1]{0}', space=sflag, size = 0x4, scoped, tag = 'scoped memory for tpu_custom_call.1']
    #allocation10 [shape = 'u8[512]{0}', space=smem, size = 0x200, scoped, tag = 'output window, operand 0, single buffered']
    %7 = vsyncpa [#allocation6], 0
    %8 = vsyncpa [#allocation9], 0
    %9 = vsyncpa [#allocation7], 0
    // Predicated region
    $region2: #{tpu_custom_call.1} parent=1 // pred_check
      _
    $region3: #{tpu_custom_call.1} parent=1 // pred_check_branch
      %11 = sbr.rel (0) target = $region5
    $region4: #{tpu_custom_call.1} parent=1 // pred_region
      %13 = vsyncadd [#allocation6], 0
      %s15 = sshll.u32 %s0, 4
      %s16 = int_to_ptr.hbm [resolvable:$true] %s15
      %s17 = sshll.u32 [#allocation5], 4
      %s18 = int_to_ptr.vmem [resolvable:$true] %s17
      %20 = dma.hbm_to_vmem [thread:$0]  %s16, 128, %s18, [#allocation6]
    $region5: #{tpu_custom_call.1} parent=1 // pred_fallthru
      _
    // Predicated region
    $region6: #{tpu_custom_call.1} parent=1 // pred_check
      _
    $region7: #{tpu_custom_call.1} parent=1 // pred_check_branch
      %22 = sbr.rel (0) target = $region9
    $region8: #{tpu_custom_call.1} parent=1 // pred_region
      %24 = vsyncadd [#allocation9], 0
      %s25 = sshll.u32 %s1, 4
      %s26 = int_to_ptr.hbm [resolvable:$true] %s25
      %s27 = sshll.u32 [#allocation8], 4
      %s28 = int_to_ptr.vmem [resolvable:$true] %s27
      %33 = dma.hbm_to_vmem [thread:$0]  %s26, 256, %s28, [#allocation9], 128, 128, 8
    $region9: #{tpu_custom_call.1} parent=1 // pred_fallthru
      _
    // Predicated region
    $region10: #{tpu_custom_call.1} parent=1 // pred_check
      _
    $region11: #{tpu_custom_call.1} parent=1 // pred_check_branch
      %35 = sbr.rel (0) target = $region13
    $region12: #{tpu_custom_call.1} parent=1 // pred_region
      %37 = dma.done [#allocation6], 128
    $region13: #{tpu_custom_call.1} parent=1 // pred_fallthru
      _
    // Predicated region
    $region14: #{tpu_custom_call.1} parent=1 // pred_check
      _
    $region15: #{tpu_custom_call.1} parent=1 // pred_check_branch
      %39 = sbr.rel (0) target = $region17
    $region16: #{tpu_custom_call.1} parent=1 // pred_region
      %41 = dma.done [#allocation9], 256
    $region17: #{tpu_custom_call.1} parent=1 // pred_fallthru
      _
    %p43 = scmp.eq.s32.totalorder 0, 0
    // Predicated region
    $region18: #{tpu_custom_call.1} parent=1 // pred_check
      %p44 = pneg %p43
    $region19: #{tpu_custom_call.1} parent=1 // pred_check_branch
      %46 = sbr.rel (%p44) target = $region21
    $region20: #{tpu_custom_call.1} parent=1 // pred_region
      %v47 = vld [vmem:[#allocation8] sm:$0xff]
      %v48 = vld [vmem:[#allocation8 + $0x8] sm:$0xff]
      %v49 = vtanh.pop %v47
      %v50 = vtanh.pop %v48
      %v51 = vpack.c.bf16 %v49, %v49
      %v52 = vpack.c.bf16 %v50, %v50
      %53 = vst [vmem:[#allocation2] sm:$0xf] %v51
      %54 = vst [vmem:[#allocation2 + $0x4] sm:$0xf] %v52
      %vm55 = vcmask 7168
      %56 = vst.msk [vmem:[#allocation3] sm:$0xff] %vm55, 0.0
      %57 = vst.msk [vmem:[#allocation4] sm:$0xff] %vm55, 0.0
    $region21: #{tpu_custom_call.1} parent=1 // pred_fallthru
      _
    %v58 = vld [vmem:[#allocation5] sm:$0xff]
    %v59 = vtanh.pop %v58
    %v60 = vpack.c.bf16 %v59, %v58
    %v61 = vld [vmem:[#allocation2] sm:$0xf]
    %v62 = vld [vmem:[#allocation2 + $0x4] sm:$0xf]
    %v65 = vunpack.c.l.b16 %v61
    %v66 = vunpack.c.l.b16 %v62
    %v67 = vpack.c.b16 %v66, %v65
    %69 = vmatpush.bf16.xpose.msra.mxu0 0
    %70 = vmatpush.bf16.xpose.msra.mxu0 0
    %71 = vmatpush.bf16.xpose.msra.mxu0 0
    %72 = vmatpush.bf16.xpose.msra.mxu0 0
    %73 = vmatpush.bf16.xpose.msra.mxu0 0
    %74 = vmatpush.bf16.xpose.msra.mxu0 0
    %75 = vmatpush.bf16.xpose.msra.mxu0 0
    %76 = vmatpush.bf16.xpose.msra.mxu0 %v67
    %77 = vmatmul.bf16.gmra.mxu0 %v60
    %v78 = vpop.f32.mrf.mxu0
    %v79 = vadd.f32 0.0, %v78
    %v80 = vpop.f32.mrf.mxu0
    %v81 = vadd.f32 0.0, %v80
    %82 = vdwg.mxu0
    %v83 = vlaneseq
    %v84 = vshrl.u32 %v83, 7
    %s85 = smul.u32 0, 8
    %v86 = vstv %s85
    %v87 = vadd.s32 %v84, %v86
    %v88 = vlaneseq
    %v89 = vand.u32 %v88, 127
    %vm90 = vcmp.eq.s32.totalorder %v87, %v89
    %v91 = vsel %vm90, %v79, 0.0
    %vm92 = vcmask 130048
    %v93 = vsel %vm92, %v91, 0.0
    %94 = vadd.xlane.f32.xlu0 %v93
    %v95 = vpop.xlane.xlu0 %94
    %v96 = vsel %vm90, %v81, 0.0
    %v97 = vsel %vm92, %v96, 0.0
    %98 = vadd.xlane.f32.xlu0 %v97
    %v99 = vpop.xlane.xlu0 %98
    %v100 = vsel %vm92, %v79, -inf
    %101 = vmax.xlane.f32.xlu0 %v100
    %v102 = vpop.xlane.xlu0 %101
    %v103 = vsub.f32 %v79, %v102
    %v104 = vmul.f32 %v103, 1.442695
    %v105 = vpow.pop %v104
    %v106 = vsel %vm92, %v105, 0.0
    %107 = vadd.xlane.f32.xlu0 %v106
    %v108 = vpop.xlane.xlu0 %107
    %v109 = vlog2.pop %v108
    %v110 = vmul.f32 %v109, 0.6931472
    %v111 = vadd.f32 %v102, %v110
    %v112 = vld [vmem:[#allocation3] sm:$0xff]
    %v113 = vsub.f32 %v111, %v95
    %v114 = vadd.f32 %v112, %v113
    %vm115 = vcmask 7168
    %116 = vst.msk [vmem:[#allocation3] sm:$0xff] %vm115, %v114
    %v117 = vsub.f32 2.0, %v99
    %v118 = vadd.f32 %v117, %v81
    %v119 = vmax.f32 %v118, 0.0
    %v120 = vsel %vm90, 0.0, %v119
    %v121 = vld [vmem:[#allocation4] sm:$0xff]
    %v122 = vsel %vm92, %v120, 0.0
    %123 = vadd.xlane.f32.xlu0 %v122
    %v124 = vpop.xlane.xlu0 %123
    %v125 = vadd.f32 %v121, %v124
    %126 = vst.msk [vmem:[#allocation4] sm:$0xff] %vm115, %v125
    // Predicated region
    $region22: #{tpu_custom_call.1} parent=1 // pred_check
      %p127 = pneg %p43
    $region23: #{tpu_custom_call.1} parent=1 // pred_check_branch
      %129 = sbr.rel (%p127) target = $region25
    $region24: #{tpu_custom_call.1} parent=1 // pred_region
      %v130 = vld [vmem:[#allocation3] sm:$0xff]
      %v131 = vsel %vm115, %v130, 0.0
      %132 = vadd.xlane.f32.xlu0 %v131
      %v133 = vpop.xlane.xlu0 %132
      %v134 = vrot.slane %v133, 4
      %v135 = vadd.f32 %v133, %v134
      %v136 = vrot.slane %v135, 2
      %v137 = vadd.f32 %v135, %v136
      %v138 = vrot.slane %v137, 1
      %v139 = vadd.f32 %v137, %v138
      %s140 = vtos %v139
      %v141 = vstv %s140
      %v142 = vrcp.pop 8.0
      %v143 = vmul.f32 8.0, %v142
      %v144 = vsub.f32 1.0, %v143
      %v145 = vmul.f32 %v142, %v144
      %v146 = vadd.f32 %v142, %v145
      %vm147 = vweird.f32 %v142
      %v148 = vsel %vm147, %v142, %v146
      %v149 = vmul.f32 %v141, %v148
      %v150 = vld [vmem:[#allocation4] sm:$0xff]
      %v151 = vsel %vm115, %v150, 0.0
      %152 = vadd.xlane.f32.xlu0 %v151
      %v153 = vpop.xlane.xlu0 %152
      %v154 = vrot.slane %v153, 4
      %v155 = vadd.f32 %v153, %v154
      %v156 = vrot.slane %v155, 2
      %v157 = vadd.f32 %v155, %v156
      %v158 = vrot.slane %v157, 1
      %v159 = vadd.f32 %v157, %v158
      %s160 = vtos %v159
      %v161 = vstv %s160
      %v162 = vrcp.pop 120.0
      %v163 = vmul.f32 120.0, %v162
      %v164 = vsub.f32 1.0, %v163
      %v165 = vmul.f32 %v162, %v164
      %v166 = vadd.f32 %v162, %v165
      %vm167 = vweird.f32 %v162
      %v168 = vsel %vm167, %v162, %v166
      %v169 = vmul.f32 %v161, %v168
      %v170 = vadd.f32 %v149, %v169
      %s171 = vtos %v170
      %s172 = scalar_lea.smem [#allocation10], 0
      %173 = sst [smem:[%s172]] %s171
    $region25: #{tpu_custom_call.1} parent=1 // pred_fallthru
      _
    // Predicated region
    $region26: #{tpu_custom_call.1} parent=1 // pred_check
      _
    $region27: #{tpu_custom_call.1} parent=1 // pred_check_branch
      %175 = sbr.rel (0) target = $region29
    $region28: #{tpu_custom_call.1} parent=1 // pred_region
      %177 = vsyncadd [#allocation7], 0
      %s179 = sshll.u32 %s2, 4
      %s180 = int_to_ptr.hbm [resolvable:$true] %s179
      %182 = dma.smem_to_hbm [#allocation10], 16, %s180, [#allocation7]
    $region29: #{tpu_custom_call.1} parent=1 // pred_fallthru
      _
    // Predicated region
    $region30: #{tpu_custom_call.1} parent=1 // pred_check
      _
    $region31: #{tpu_custom_call.1} parent=1 // pred_check_branch
      %184 = sbr.rel (0) target = $region33
    $region32: #{tpu_custom_call.1} parent=1 // pred_region
      %186 = dma.done [#allocation7], 16
    $region33: #{tpu_custom_call.1} parent=1 // pred_fallthru
      _
    %187 = sfence
    %188 = vsyncpa [#allocation6], 1
    %189 = vsyncpa [#allocation9], 1
    %190 = vsyncpa [#allocation7], 1

// kernel: tpu_custom_call.1
$region0: #{tpu_custom_call.1}
  #allocation0 [shape = 'u32[]', space=smem, size = 0x4, offset = 0x4, fixed_abs, tag = 'smem constant byte address 0x4 - core index']
  #allocation1 [shape = 'u32[72,128]{1,0:T(1,128)}', space=vmem, size = 0x9000, scoped, tag = 'internal scratch']
  #allocation2 [shape = 'bf16[16,128]{1,0:T(8,128)(2,1)}', space=vmem, size = 0x1000, scoped, tag = 'scratch operand']
  #allocation3 [shape = 'f32[8,1]{1,0:T(8,128)}', space=vmem, size = 0x1000, scoped, tag = 'scratch operand']
  #allocation4 [shape = 'f32[8,1]{1,0:T(8,128)}', space=vmem, size = 0x1000, scoped, tag = 'scratch operand']
  %s0 = inlined_call_operand.hbm [shape: f32[8,128], index: 0, kind: input, shape index: {}]
  %s1 = inlined_call_operand.hbm [shape: f32[16,128], index: 1, kind: input, shape index: {}]
  %s2 = inlined_call_operand.hbm [shape: f32[1,1], index: 2, kind: output, shape index: {}]
  %s3 = sld [smem:[#allocation0]]
  $region34: #{tpu_custom_call.1} parent=0
    _
  %s5 = ssub.s32 1, %s3
  %s6 = scalar_select 0, %s5, %s3
  $region1: #{tpu_custom_call.1} parent=0
    #allocation5 [shape = 'u8[4096]{0}', space=vmem, size = 0x1000, scoped, tag = 'input window, operand 0, single buffered']
    #allocation6 [shape = 's32[1]{0}', space=sflag, size = 0x4, scoped, tag = 'scoped memory for tpu_custom_call.1']
    #allocation7 [shape = 's32[1]{0}', space=sflag, size = 0x4, scoped, tag = 'scoped memory for tpu_custom_call.1']
    #allocation8 [shape = 'u8[8192]{0}', space=vmem, size = 0x2000, scoped, tag = 'input window, operand 1, single buffered']
    #allocation9 [shape = 's32[1]{0}', space=sflag, size = 0x4, scoped, tag = 'scoped memory for tpu_custom_call.1']
    #allocation10 [shape = 'u8[512]{0}', space=smem, size = 0x200, scoped, tag = 'output window, operand 0, single buffered']
    %7 = vsyncpa [#allocation6], 0
    %8 = vsyncpa [#allocation9], 0
    %9 = vsyncpa [#allocation7], 0
    // Predicated region
    $region2: #{tpu_custom_call.1} parent=1 // pred_check
      _
    $region3: #{tpu_custom_call.1} parent=1 // pred_check_branch
      %11 = sbr.rel (0) target = $region5
    $region4: #{tpu_custom_call.1} parent=1 // pred_region
      %13 = vsyncadd [#allocation6], 0
      %s15 = sshll.u32 %s0, 4
      %s16 = int_to_ptr.hbm [resolvable:$true] %s15
      %s17 = sshll.u32 [#allocation5], 4
      %s18 = int_to_ptr.vmem [resolvable:$true] %s17
      %20 = dma.hbm_to_vmem [thread:$0]  %s16, 128, %s18, [#allocation6]
    $region5: #{tpu_custom_call.1} parent=1 // pred_fallthru
      _
    // Predicated region
    $region6: #{tpu_custom_call.1} parent=1 // pred_check
      _
    $region7: #{tpu_custom_call.1} parent=1 // pred_check_branch
      %22 = sbr.rel (0) target = $region9
    $region8: #{tpu_custom_call.1} parent=1 // pred_region
      %24 = vsyncadd [#allocation9], 0
      %s25 = sshll.u32 %s1, 4
      %s26 = int_to_ptr.hbm [resolvable:$true] %s25
      %s27 = sshll.u32 [#allocation8], 4
      %s28 = int_to_ptr.vmem [resolvable:$true] %s27
      %33 = dma.hbm_to_vmem [thread:$0]  %s26, 256, %s28, [#allocation9], 128, 128, 8
    $region9: #{tpu_custom_call.1} parent=1 // pred_fallthru
      _
    // Predicated region
    $region10: #{tpu_custom_call.1} parent=1 // pred_check
      _
    $region11: #{tpu_custom_call.1} parent=1 // pred_check_branch
      %35 = sbr.rel (0) target = $region13
    $region12: #{tpu_custom_call.1} parent=1 // pred_region
      %37 = dma.done [#allocation6], 128
    $region13: #{tpu_custom_call.1} parent=1 // pred_fallthru
      _
    // Predicated region
    $region14: #{tpu_custom_call.1} parent=1 // pred_check
      _
    $region15: #{tpu_custom_call.1} parent=1 // pred_check_branch
      %39 = sbr.rel (0) target = $region17
    $region16: #{tpu_custom_call.1} parent=1 // pred_region
      %41 = dma.done [#allocation9], 256
    $region17: #{tpu_custom_call.1} parent=1 // pred_fallthru
      _
    %p43 = scmp.eq.s32.totalorder 0, 0
    // Predicated region
    $region18: #{tpu_custom_call.1} parent=1 // pred_check
      %p44 = pneg %p43
    $region19: #{tpu_custom_call.1} parent=1 // pred_check_branch
      %46 = sbr.rel (%p44) target = $region21
    $region20: #{tpu_custom_call.1} parent=1 // pred_region
      %v47 = vld [vmem:[#allocation8] sm:$0xff]
      %v48 = vld [vmem:[#allocation8 + $0x8] sm:$0xff]
      %v49 = vtanh.pop %v47
      %v50 = vtanh.pop %v48
      %v51 = vpack.c.bf16 %v49, %v49
      %v52 = vpack.c.bf16 %v50, %v50
      %53 = vst [vmem:[#allocation2] sm:$0xf] %v51
      %54 = vst [vmem:[#allocation2 + $0x4] sm:$0xf] %v52
      %vm55 = vcmask 7168
      %56 = vst.msk [vmem:[#allocation3] sm:$0xff] %vm55, 0.0
      %57 = vst.msk [vmem:[#allocation4] sm:$0xff] %vm55, 0.0
    $region21: #{tpu_custom_call.1} parent=1 // pred_fallthru
      _
    %v58 = vld [vmem:[#allocation5] sm:$0xff]
    %v59 = vtanh.pop %v58
    %v60 = vpack.c.bf16 %v59, %v58
    %v61 = vld [vmem:[#allocation2] sm:$0xf]
    %v62 = vld [vmem:[#allocation2 + $0x4] sm:$0xf]
    %v65 = vunpack.c.l.b16 %v61
    %v66 = vunpack.c.l.b16 %v62
    %v67 = vpack.c.b16 %v66, %v65
    %69 = vmatpush.bf16.xpose.msra.mxu0 0
    %70 = vmatpush.bf16.xpose.msra.mxu0 0
    %71 = vmatpush.bf16.xpose.msra.mxu0 0
    %72 = vmatpush.bf16.xpose.msra.mxu0 0
    %73 = vmatpush.bf16.xpose.msra.mxu0 0
    %74 = vmatpush.bf16.xpose.msra.mxu0 0
    %75 = vmatpush.bf16.xpose.msra.mxu0 0
    %76 = vmatpush.bf16.xpose.msra.mxu0 %v67
    %77 = vmatmul.bf16.gmra.mxu0 %v60
    %v78 = vpop.f32.mrf.mxu0
    %v79 = vadd.f32 0.0, %v78
    %v80 = vpop.f32.mrf.mxu0
    %v81 = vadd.f32 0.0, %v80
    %82 = vdwg.mxu0
    %v83 = vlaneseq
    %v84 = vshrl.u32 %v83, 7
    %s85 = smul.u32 0, 8
    %v86 = vstv %s85
    %v87 = vadd.s32 %v84, %v86
    %v88 = vlaneseq
    %v89 = vand.u32 %v88, 127
    %vm90 = vcmp.eq.s32.totalorder %v87, %v89
    %v91 = vsel %vm90, %v79, 0.0
    %vm92 = vcmask 130048
    %v93 = vsel %vm92, %v91, 0.0
    %94 = vadd.xlane.f32.xlu0 %v93
    %v95 = vpop.xlane.xlu0 %94
    %v96 = vsel %vm90, %v81, 0.0
    %v97 = vsel %vm92, %v96, 0.0
    %98 = vadd.xlane.f32.xlu0 %v97
    %v99 = vpop.xlane.xlu0 %98
    %v100 = vsel %vm92, %v79, -inf
    %101 = vmax.xlane.f32.xlu0 %v100
    %v102 = vpop.xlane.xlu0 %101
    %v103 = vsub.f32 %v79, %v102
    %v104 = vmul.f32 %v103, 1.442695
    %v105 = vpow.pop %v104
    %v106 = vsel %vm92, %v105, 0.0
    %107 = vadd.xlane.f32.xlu0 %v106
    %v108 = vpop.xlane.xlu0 %107
    %v109 = vlog2.pop %v108
    %v110 = vmul.f32 %v109, 0.6931472
    %v111 = vadd.f32 %v102, %v110
    %v112 = vld [vmem:[#allocation3] sm:$0xff]
    %v113 = vsub.f32 %v111, %v95
    %v114 = vadd.f32 %v112, %v113
    %vm115 = vcmask 7168
    %116 = vst.msk [vmem:[#allocation3] sm:$0xff] %vm115, %v114
    %v117 = vsub.f32 2.0, %v99
    %v118 = vadd.f32 %v117, %v81
    %v119 = vmax.f32 %v118, 0.0
    %v120 = vsel %vm90, 0.0, %v119
    %v121 = vld [vmem:[#allocation4] sm:$0xff]
    %v122 = vsel %vm92, %v120, 0.0
    %123 = vadd.xlane.f32.xlu0 %v122
    %v124 = vpop.xlane.xlu0 %123
    %v125 = vadd.f32 %v121, %v124
    %126 = vst.msk [vmem:[#allocation4] sm:$0xff] %vm115, %v125
    // Predicated region
    $region22: #{tpu_custom_call.1} parent=1 // pred_check
      %p127 = pneg %p43
    $region23: #{tpu_custom_call.1} parent=1 // pred_check_branch
      %129 = sbr.rel (%p127) target = $region25
    $region24: #{tpu_custom_call.1} parent=1 // pred_region
      %v130 = vld [vmem:[#allocation3] sm:$0xff]
      %v131 = vsel %vm115, %v130, 0.0
      %132 = vadd.xlane.f32.xlu0 %v131
      %v133 = vpop.xlane.xlu0 %132
      %v134 = vrot.slane %v133, 4
      %v135 = vadd.f32 %v133, %v134
      %v136 = vrot.slane %v135, 2
      %v137 = vadd.f32 %v135, %v136
      %v138 = vrot.slane %v137, 1
      %v139 = vadd.f32 %v137, %v138
      %s140 = vtos %v139
      %v141 = vstv %s140
      %v142 = vrcp.pop 8.0
      %v143 = vmul.f32 8.0, %v142
      %v144 = vsub.f32 1.0, %v143
      %v145 = vmul.f32 %v142, %v144
      %v146 = vadd.f32 %v142, %v145
      %vm147 = vweird.f32 %v142
      %v148 = vsel %vm147, %v142, %v146
      %v149 = vmul.f32 %v141, %v148
      %v150 = vld [vmem:[#allocation4] sm:$0xff]
      %v151 = vsel %vm115, %v150, 0.0
      %152 = vadd.xlane.f32.xlu0 %v151
      %v153 = vpop.xlane.xlu0 %152
      %v154 = vrot.slane %v153, 4
      %v155 = vadd.f32 %v153, %v154
      %v156 = vrot.slane %v155, 2
      %v157 = vadd.f32 %v155, %v156
      %v158 = vrot.slane %v157, 1
      %v159 = vadd.f32 %v157, %v158
      %s160 = vtos %v159
      %v161 = vstv %s160
      %v162 = vrcp.pop 120.0
      %v163 = vmul.f32 120.0, %v162
      %v164 = vsub.f32 1.0, %v163
      %v165 = vmul.f32 %v162, %v164
      %v166 = vadd.f32 %v162, %v165
      %vm167 = vweird.f32 %v162
      %v168 = vsel %vm167, %v162, %v166
      %v169 = vmul.f32 %v161, %v168
      %v170 = vadd.f32 %v149, %v169
      %s171 = vtos %v170
      %s172 = scalar_lea.smem [#allocation10], 0
      %173 = sst [smem:[%s172]] %s171
    $region25: #{tpu_custom_call.1} parent=1 // pred_fallthru
      _
    // Predicated region
    $region26: #{tpu_custom_call.1} parent=1 // pred_check
      _
    $region27: #{tpu_custom_call.1} parent=1 // pred_check_branch
      %175 = sbr.rel (0) target = $region29
    $region28: #{tpu_custom_call.1} parent=1 // pred_region
      %177 = vsyncadd [#allocation7], 0
      %s179 = sshll.u32 %s2, 4
      %s180 = int_to_ptr.hbm [resolvable:$true] %s179
      %182 = dma.smem_to_hbm [#allocation10], 16, %s180, [#allocation7]
    $region29: #{tpu_custom_call.1} parent=1 // pred_fallthru
      _
    // Predicated region
    $region30: #{tpu_custom_call.1} parent=1 // pred_check
      _
    $region31: #{tpu_custom_call.1} parent=1 // pred_check_branch
      %184 = sbr.rel (0) target = $region33
    $region32: #{tpu_custom_call.1} parent=1 // pred_region
      %186 = dma.done [#allocation7], 16
    $region33: #{tpu_custom_call.1} parent=1 // pred_fallthru
      _
    %187 = sfence
    %188 = vsyncpa [#allocation6], 1
    %189 = vsyncpa [#allocation9], 1
    %190 = vsyncpa [#allocation7], 1

</llo_original>
